<compile_context>
chip_gen: v7x
topology: tpu7x:2x2x1
jax: 0.10.0
libtpu: 0.0.40
codegen_flags: <defaults>
</compile_context>

<pallas_src>
import jax
import jax.numpy as jnp
from jax.experimental import pallas as pl
from jax.experimental.pallas import tpu as pltpu

EPS = 1e-6
_SQRT1_2 = 0.7071067811865476

# Offsets into the packed (61,) float32 parameter vector living in SMEM.
_G1, _BE1, _W1, _B1 = 0, 4, 8, 24          # LN1 gamma/beta, dense1 W(out,in)/b
_G2, _BE2, _WP, _BP = 28, 32, 36, 40       # LN2 gamma/beta, proj  W(out,in)/b
_W2, _B2 = 41, 57                          # dense2 W(out,in)/b
_NPARAMS = 61


def _gmlp_kernel(p_ref, x_ref, o_ref):
    """x_ref/o_ref: (1, 4, R, 128) VMEM blocks.  p_ref: (61,) f32 in SMEM."""
    f32 = jnp.float32
    # Four lane-dense (R, 128) feature planes of this block.
    xs = [x_ref[0, k, :, :].astype(f32) for k in range(4)]

    def s(i):                                   # scalar parameter from SMEM
        return p_ref[i]

    def layer_norm(vs, g_off, b_off):           # LayerNorm over the 4 planes
        mu = (vs[0] + vs[1] + vs[2] + vs[3]) * 0.25
        d = [v - mu for v in vs]
        var = (d[0] * d[0] + d[1] * d[1] + d[2] * d[2] + d[3] * d[3]) * 0.25
        inv = jax.lax.rsqrt(var + EPS)
        return [d[k] * inv * s(g_off + k) + s(b_off + k) for k in range(4)]

    def linear(vs, w_off, b_off, n_out):        # unrolled VPU FMAs (no MXU)
        outs = []
        for j in range(n_out):
            acc = vs[0] * s(w_off + 4 * j)
            for k in range(1, 4):
                acc = acc + vs[k] * s(w_off + 4 * j + k)
            outs.append(acc + s(b_off + j))
        return outs

    xn = layer_norm(xs, _G1, _BE1)                                   # bn1
    h = linear(xn, _W1, _B1, 4)                                      # dense1
    h = [0.5 * v * (1.0 + jax.lax.erf(v * _SQRT1_2)) for v in h]     # GELU
    hn = layer_norm(h, _G2, _BE2)                                    # bn2
    gate = linear(hn, _WP, _BP, 1)[0]                                # proj -> (R,128)
    out = linear([gate * v for v in h], _W2, _B2, 4)                 # dense2

    for j in range(4):
        o_ref[0, j, :, :] = out[j].astype(o_ref.dtype)


def pack_params(params):
    """Pack the 10 small parameter arrays into one flat f32 vector for SMEM."""
    g1, be1, w1t, b1, g2, be2, wpt, bp, w2t, b2 = params
    w1 = w1t.T          # (out, in): h_j = sum_k x_k * W[j, k]
    wp = wpt.T          # (1, 4)
    w2 = w2t.T
    flat = jnp.concatenate([
        g1.reshape(-1), be1.reshape(-1),
        w1.reshape(-1), b1.reshape(-1),
        g2.reshape(-1), be2.reshape(-1),
        wp.reshape(-1), bp.reshape(-1),
        w2.reshape(-1), b2.reshape(-1),
    ]).astype(jnp.float32)
    assert flat.shape == (_NPARAMS,)
    return flat


def gmlp_forward(x, params, *, block_rows=1024):
    """Full gMLP.forward: (B, C, H, W) -> (B, C, H, W), transpose-free."""
    B, C, H, W = x.shape
    M = C * (H // 2) * (W // 2)
    pflat = pack_params(params)

    # Free reinterpretation of contiguous NCHW memory (no data movement).
    x3 = x.reshape(B, 4, M)
    Mp = M
    if M % 128 != 0:
        # TODO(synk): rare ragged-lane case; pads the minor dim instead of a
        # masked tail (main path is pad-free).
        Mp = pl.cdiv(M, 128) * 128
        x3 = jnp.pad(x3, ((0, 0), (0, 0), (0, Mp - M)))
    G = Mp // 128
    x4 = x3.reshape(B, 4, G, 128)            # free: split of contiguous minor dim

    rg = G if G <= block_rows else block_rows   # full extent or multiple of 8
    spec = pl.BlockSpec((1, 4, rg, 128), lambda b, g: (b, 0, g, 0))

    out4 = pl.pallas_call(
        _gmlp_kernel,
        out_shape=jax.ShapeDtypeStruct(x4.shape, x4.dtype),
        grid_spec=pltpu.PrefetchScalarGridSpec(
            num_scalar_prefetch=0,
            grid=(B, pl.cdiv(G, rg)),
            in_specs=[
                pl.BlockSpec(memory_space=pltpu.MemorySpace.SMEM),  # packed params
                spec,                                               # activations
            ],
            out_specs=spec,
        ),
        compiler_params=pltpu.CompilerParams(
            dimension_semantics=("parallel", "parallel")),
    )(pflat, x4)

    out = out4.reshape(B, 4, Mp)
    if Mp != M:
        out = out[:, :, :M]
    # Free reinterpretation back to NCHW (matches the module's final
    # permute(0,3,2,1).reshape(B,C,H,W), which is the inverse of the input view).
    return out.reshape(B, C, H, W)


def gmlp_reference(x, params):
    """Pure-JAX transcription of the PyTorch forward (for validation)."""
    g1, be1, w1t, b1, g2, be2, wpt, bp, w2t, b2 = params
    B, C, H, W = x.shape
    S = (H // 2) * (W // 2)
    xr = x.reshape(B, 4, C, H // 2, W // 2).transpose(0, 3, 4, 2, 1).reshape(B, S, C, 4)

    def ln(v, g, b):
        mu = jnp.mean(v, axis=-1, keepdims=True)
        var = jnp.mean((v - mu) ** 2, axis=-1, keepdims=True)
        return (v - mu) * jax.lax.rsqrt(var + EPS) * g[0] + b[0]

    h = ln(xr, g1, be1) @ w1t + b1[0]
    h = 0.5 * h * (1.0 + jax.lax.erf(h * _SQRT1_2))
    conn = h
    hn = ln(h, g2, be2)
    p = hn @ wpt + bp[0]
    out = (p * conn) @ w2t + b2[0]
    return out.transpose(0, 3, 2, 1).reshape(B, C, H, W)


def init_params(key):
    """Deterministic synthetic parameters matching the module's shapes."""
    ks = jax.random.split(key, 8)
    f32 = jnp.float32
    g1 = (1.0 + 0.1 * jax.random.normal(ks[0], (1, 4))).astype(f32)
    be1 = (0.1 * jax.random.normal(ks[1], (1, 4))).astype(f32)
    w1t = (0.5 * jax.random.normal(ks[2], (4, 4))).astype(f32)   # dense1 W^T
    b1 = (0.1 * jax.random.normal(ks[3], (1, 4))).astype(f32)
    g2 = (1.0 + 0.1 * jax.random.normal(ks[4], (1, 4))).astype(f32)
    be2 = (0.1 * jax.random.normal(ks[5], (1, 4))).astype(f32)
    wpt = (0.5 * jax.random.normal(ks[6], (4, 1))).astype(f32)   # proj W^T
    bp = jnp.array([[0.05]], dtype=f32)
    w2t = (0.5 * jax.random.normal(ks[7], (4, 4))).astype(f32)   # dense2 W^T
    b2 = jnp.full((1, 4), 0.02, dtype=f32)
    return (g1, be1, w1t, b1, g2, be2, wpt, bp, w2t, b2)


if __name__ == "__main__":
    key = jax.random.PRNGKey(0)
    k_x, k_p = jax.random.split(key)

    B, C, H, W = 2, 4, 16, 16
    x = jax.random.normal(k_x, (B, C, H, W), dtype=jnp.float32)
    params = init_params(k_p)

    out = jax.block_until_ready(gmlp_forward(x, params))
    ref = gmlp_reference(x, params)

    assert out.shape == (B, C, H, W)
    assert jnp.allclose(out, ref, rtol=2e-4, atol=5e-5), "Pallas output mismatch"

    print("KERNEL_OK")
</pallas_src>

<mosaic_0001>
module attributes {stable_mosaic.version = 11 : i64} {
  func.func @_gmlp_kernel(%arg0: i32, %arg1: i32, %arg2: memref<61xf32, #tpu.memory_space<smem>>, %arg3: memref<1x4x2x128xf32, #tpu.memory_space<vmem>>, %arg4: memref<1x4x2x128xf32, #tpu.memory_space<vmem>>) attributes {dimension_semantics = [#tpu.dimension_semantics<parallel>, #tpu.dimension_semantics<parallel>], iteration_bounds = array<i64: 2, 1>, scalar_prefetch = 0 : i64, scratch_operands = 0 : i64, tpu.core_type = #tpu.core_type<tc>, window_params = [{transform_indices = @transform_0, window_bounds = array<i64: 61>}, {transform_indices = @transform_1, window_bounds = array<i64: 1, 4, 2, 128>}, {transform_indices = @transform_2, window_bounds = array<i64: 1, 4, 2, 128>}]} {
    %c0 = arith.constant 0 : index
    %c0_0 = arith.constant 0 : index
    %c0_1 = arith.constant 0 : index
    %c0_2 = arith.constant 0 : index
    %0 = vector.load %arg3[%c0, %c0_0, %c0_1, %c0_2] : memref<1x4x2x128xf32, #tpu.memory_space<vmem>>, vector<1x1x2x128xf32>
    %1 = vector.shape_cast %0 : vector<1x1x2x128xf32> to vector<2x128xf32>
    %c0_3 = arith.constant 0 : index
    %c1 = arith.constant 1 : index
    %c0_4 = arith.constant 0 : index
    %c0_5 = arith.constant 0 : index
    %2 = vector.load %arg3[%c0_3, %c1, %c0_4, %c0_5] : memref<1x4x2x128xf32, #tpu.memory_space<vmem>>, vector<1x1x2x128xf32>
    %3 = vector.shape_cast %2 : vector<1x1x2x128xf32> to vector<2x128xf32>
    %c0_6 = arith.constant 0 : index
    %c2 = arith.constant 2 : index
    %c0_7 = arith.constant 0 : index
    %c0_8 = arith.constant 0 : index
    %4 = vector.load %arg3[%c0_6, %c2, %c0_7, %c0_8] : memref<1x4x2x128xf32, #tpu.memory_space<vmem>>, vector<1x1x2x128xf32>
    %5 = vector.shape_cast %4 : vector<1x1x2x128xf32> to vector<2x128xf32>
    %c0_9 = arith.constant 0 : index
    %c3 = arith.constant 3 : index
    %c0_10 = arith.constant 0 : index
    %c0_11 = arith.constant 0 : index
    %6 = vector.load %arg3[%c0_9, %c3, %c0_10, %c0_11] : memref<1x4x2x128xf32, #tpu.memory_space<vmem>>, vector<1x1x2x128xf32>
    %7 = vector.shape_cast %6 : vector<1x1x2x128xf32> to vector<2x128xf32>
    %8 = arith.addf %1, %3 : vector<2x128xf32>
    %9 = arith.addf %8, %5 : vector<2x128xf32>
    %10 = arith.addf %9, %7 : vector<2x128xf32>
    %cst = arith.constant 2.500000e-01 : f32
    %11 = vector.broadcast %cst : f32 to vector<2x128xf32>
    %12 = arith.mulf %10, %11 : vector<2x128xf32>
    %13 = arith.subf %1, %12 : vector<2x128xf32>
    %14 = arith.subf %3, %12 : vector<2x128xf32>
    %15 = arith.subf %5, %12 : vector<2x128xf32>
    %16 = arith.subf %7, %12 : vector<2x128xf32>
    %17 = arith.mulf %13, %13 : vector<2x128xf32>
    %18 = arith.mulf %14, %14 : vector<2x128xf32>
    %19 = arith.addf %17, %18 : vector<2x128xf32>
    %20 = arith.mulf %15, %15 : vector<2x128xf32>
    %21 = arith.addf %19, %20 : vector<2x128xf32>
    %22 = arith.mulf %16, %16 : vector<2x128xf32>
    %23 = arith.addf %21, %22 : vector<2x128xf32>
    %cst_12 = arith.constant 2.500000e-01 : f32
    %24 = vector.broadcast %cst_12 : f32 to vector<2x128xf32>
    %25 = arith.mulf %23, %24 : vector<2x128xf32>
    %cst_13 = arith.constant 9.99999997E-7 : f32
    %26 = vector.broadcast %cst_13 : f32 to vector<2x128xf32>
    %27 = arith.addf %25, %26 : vector<2x128xf32>
    %28 = math.rsqrt %27 : vector<2x128xf32>
    %29 = arith.mulf %13, %28 : vector<2x128xf32>
    %c0_14 = arith.constant 0 : index
    %30 = memref.load %arg2[%c0_14] : memref<61xf32, #tpu.memory_space<smem>>
    %31 = vector.broadcast %30 : f32 to vector<2x128xf32>
    %32 = arith.mulf %29, %31 : vector<2x128xf32>
    %c4 = arith.constant 4 : index
    %33 = memref.load %arg2[%c4] : memref<61xf32, #tpu.memory_space<smem>>
    %34 = vector.broadcast %33 : f32 to vector<2x128xf32>
    %35 = arith.addf %32, %34 : vector<2x128xf32>
    %36 = arith.mulf %14, %28 : vector<2x128xf32>
    %c1_15 = arith.constant 1 : index
    %37 = memref.load %arg2[%c1_15] : memref<61xf32, #tpu.memory_space<smem>>
    %38 = vector.broadcast %37 : f32 to vector<2x128xf32>
    %39 = arith.mulf %36, %38 : vector<2x128xf32>
    %c5 = arith.constant 5 : index
    %40 = memref.load %arg2[%c5] : memref<61xf32, #tpu.memory_space<smem>>
    %41 = vector.broadcast %40 : f32 to vector<2x128xf32>
    %42 = arith.addf %39, %41 : vector<2x128xf32>
    %43 = arith.mulf %15, %28 : vector<2x128xf32>
    %c2_16 = arith.constant 2 : index
    %44 = memref.load %arg2[%c2_16] : memref<61xf32, #tpu.memory_space<smem>>
    %45 = vector.broadcast %44 : f32 to vector<2x128xf32>
    %46 = arith.mulf %43, %45 : vector<2x128xf32>
    %c6 = arith.constant 6 : index
    %47 = memref.load %arg2[%c6] : memref<61xf32, #tpu.memory_space<smem>>
    %48 = vector.broadcast %47 : f32 to vector<2x128xf32>
    %49 = arith.addf %46, %48 : vector<2x128xf32>
    %50 = arith.mulf %16, %28 : vector<2x128xf32>
    %c3_17 = arith.constant 3 : index
    %51 = memref.load %arg2[%c3_17] : memref<61xf32, #tpu.memory_space<smem>>
    %52 = vector.broadcast %51 : f32 to vector<2x128xf32>
    %53 = arith.mulf %50, %52 : vector<2x128xf32>
    %c7 = arith.constant 7 : index
    %54 = memref.load %arg2[%c7] : memref<61xf32, #tpu.memory_space<smem>>
    %55 = vector.broadcast %54 : f32 to vector<2x128xf32>
    %56 = arith.addf %53, %55 : vector<2x128xf32>
    %c8 = arith.constant 8 : index
    %57 = memref.load %arg2[%c8] : memref<61xf32, #tpu.memory_space<smem>>
    %58 = vector.broadcast %57 : f32 to vector<2x128xf32>
    %59 = arith.mulf %35, %58 : vector<2x128xf32>
    %c9 = arith.constant 9 : index
    %60 = memref.load %arg2[%c9] : memref<61xf32, #tpu.memory_space<smem>>
    %61 = vector.broadcast %60 : f32 to vector<2x128xf32>
    %62 = arith.mulf %42, %61 : vector<2x128xf32>
    %63 = arith.addf %59, %62 : vector<2x128xf32>
    %c10 = arith.constant 10 : index
    %64 = memref.load %arg2[%c10] : memref<61xf32, #tpu.memory_space<smem>>
    %65 = vector.broadcast %64 : f32 to vector<2x128xf32>
    %66 = arith.mulf %49, %65 : vector<2x128xf32>
    %67 = arith.addf %63, %66 : vector<2x128xf32>
    %c11 = arith.constant 11 : index
    %68 = memref.load %arg2[%c11] : memref<61xf32, #tpu.memory_space<smem>>
    %69 = vector.broadcast %68 : f32 to vector<2x128xf32>
    %70 = arith.mulf %56, %69 : vector<2x128xf32>
    %71 = arith.addf %67, %70 : vector<2x128xf32>
    %c24 = arith.constant 24 : index
    %72 = memref.load %arg2[%c24] : memref<61xf32, #tpu.memory_space<smem>>
    %73 = vector.broadcast %72 : f32 to vector<2x128xf32>
    %74 = arith.addf %71, %73 : vector<2x128xf32>
    %c12 = arith.constant 12 : index
    %75 = memref.load %arg2[%c12] : memref<61xf32, #tpu.memory_space<smem>>
    %76 = vector.broadcast %75 : f32 to vector<2x128xf32>
    %77 = arith.mulf %35, %76 : vector<2x128xf32>
    %c13 = arith.constant 13 : index
    %78 = memref.load %arg2[%c13] : memref<61xf32, #tpu.memory_space<smem>>
    %79 = vector.broadcast %78 : f32 to vector<2x128xf32>
    %80 = arith.mulf %42, %79 : vector<2x128xf32>
    %81 = arith.addf %77, %80 : vector<2x128xf32>
    %c14 = arith.constant 14 : index
    %82 = memref.load %arg2[%c14] : memref<61xf32, #tpu.memory_space<smem>>
    %83 = vector.broadcast %82 : f32 to vector<2x128xf32>
    %84 = arith.mulf %49, %83 : vector<2x128xf32>
    %85 = arith.addf %81, %84 : vector<2x128xf32>
    %c15 = arith.constant 15 : index
    %86 = memref.load %arg2[%c15] : memref<61xf32, #tpu.memory_space<smem>>
    %87 = vector.broadcast %86 : f32 to vector<2x128xf32>
    %88 = arith.mulf %56, %87 : vector<2x128xf32>
    %89 = arith.addf %85, %88 : vector<2x128xf32>
    %c25 = arith.constant 25 : index
    %90 = memref.load %arg2[%c25] : memref<61xf32, #tpu.memory_space<smem>>
    %91 = vector.broadcast %90 : f32 to vector<2x128xf32>
    %92 = arith.addf %89, %91 : vector<2x128xf32>
    %c16 = arith.constant 16 : index
    %93 = memref.load %arg2[%c16] : memref<61xf32, #tpu.memory_space<smem>>
    %94 = vector.broadcast %93 : f32 to vector<2x128xf32>
    %95 = arith.mulf %35, %94 : vector<2x128xf32>
    %c17 = arith.constant 17 : index
    %96 = memref.load %arg2[%c17] : memref<61xf32, #tpu.memory_space<smem>>
    %97 = vector.broadcast %96 : f32 to vector<2x128xf32>
    %98 = arith.mulf %42, %97 : vector<2x128xf32>
    %99 = arith.addf %95, %98 : vector<2x128xf32>
    %c18 = arith.constant 18 : index
    %100 = memref.load %arg2[%c18] : memref<61xf32, #tpu.memory_space<smem>>
    %101 = vector.broadcast %100 : f32 to vector<2x128xf32>
    %102 = arith.mulf %49, %101 : vector<2x128xf32>
    %103 = arith.addf %99, %102 : vector<2x128xf32>
    %c19 = arith.constant 19 : index
    %104 = memref.load %arg2[%c19] : memref<61xf32, #tpu.memory_space<smem>>
    %105 = vector.broadcast %104 : f32 to vector<2x128xf32>
    %106 = arith.mulf %56, %105 : vector<2x128xf32>
    %107 = arith.addf %103, %106 : vector<2x128xf32>
    %c26 = arith.constant 26 : index
    %108 = memref.load %arg2[%c26] : memref<61xf32, #tpu.memory_space<smem>>
    %109 = vector.broadcast %108 : f32 to vector<2x128xf32>
    %110 = arith.addf %107, %109 : vector<2x128xf32>
    %c20 = arith.constant 20 : index
    %111 = memref.load %arg2[%c20] : memref<61xf32, #tpu.memory_space<smem>>
    %112 = vector.broadcast %111 : f32 to vector<2x128xf32>
    %113 = arith.mulf %35, %112 : vector<2x128xf32>
    %c21 = arith.constant 21 : index
    %114 = memref.load %arg2[%c21] : memref<61xf32, #tpu.memory_space<smem>>
    %115 = vector.broadcast %114 : f32 to vector<2x128xf32>
    %116 = arith.mulf %42, %115 : vector<2x128xf32>
    %117 = arith.addf %113, %116 : vector<2x128xf32>
    %c22 = arith.constant 22 : index
    %118 = memref.load %arg2[%c22] : memref<61xf32, #tpu.memory_space<smem>>
    %119 = vector.broadcast %118 : f32 to vector<2x128xf32>
    %120 = arith.mulf %49, %119 : vector<2x128xf32>
    %121 = arith.addf %117, %120 : vector<2x128xf32>
    %c23 = arith.constant 23 : index
    %122 = memref.load %arg2[%c23] : memref<61xf32, #tpu.memory_space<smem>>
    %123 = vector.broadcast %122 : f32 to vector<2x128xf32>
    %124 = arith.mulf %56, %123 : vector<2x128xf32>
    %125 = arith.addf %121, %124 : vector<2x128xf32>
    %c27 = arith.constant 27 : index
    %126 = memref.load %arg2[%c27] : memref<61xf32, #tpu.memory_space<smem>>
    %127 = vector.broadcast %126 : f32 to vector<2x128xf32>
    %128 = arith.addf %125, %127 : vector<2x128xf32>
    %cst_18 = arith.constant 5.000000e-01 : f32
    %129 = vector.broadcast %cst_18 : f32 to vector<2x128xf32>
    %130 = arith.mulf %129, %74 : vector<2x128xf32>
    %cst_19 = arith.constant 0.707106769 : f32
    %131 = vector.broadcast %cst_19 : f32 to vector<2x128xf32>
    %132 = arith.mulf %74, %131 : vector<2x128xf32>
    %133 = math.erf %132 : vector<2x128xf32>
    %cst_20 = arith.constant 1.000000e+00 : f32
    %134 = vector.broadcast %cst_20 : f32 to vector<2x128xf32>
    %135 = arith.addf %134, %133 : vector<2x128xf32>
    %136 = arith.mulf %130, %135 : vector<2x128xf32>
    %cst_21 = arith.constant 5.000000e-01 : f32
    %137 = vector.broadcast %cst_21 : f32 to vector<2x128xf32>
    %138 = arith.mulf %137, %92 : vector<2x128xf32>
    %cst_22 = arith.constant 0.707106769 : f32
    %139 = vector.broadcast %cst_22 : f32 to vector<2x128xf32>
    %140 = arith.mulf %92, %139 : vector<2x128xf32>
    %141 = math.erf %140 : vector<2x128xf32>
    %cst_23 = arith.constant 1.000000e+00 : f32
    %142 = vector.broadcast %cst_23 : f32 to vector<2x128xf32>
    %143 = arith.addf %142, %141 : vector<2x128xf32>
    %144 = arith.mulf %138, %143 : vector<2x128xf32>
    %cst_24 = arith.constant 5.000000e-01 : f32
    %145 = vector.broadcast %cst_24 : f32 to vector<2x128xf32>
    %146 = arith.mulf %145, %110 : vector<2x128xf32>
    %cst_25 = arith.constant 0.707106769 : f32
    %147 = vector.broadcast %cst_25 : f32 to vector<2x128xf32>
    %148 = arith.mulf %110, %147 : vector<2x128xf32>
    %149 = math.erf %148 : vector<2x128xf32>
    %cst_26 = arith.constant 1.000000e+00 : f32
    %150 = vector.broadcast %cst_26 : f32 to vector<2x128xf32>
    %151 = arith.addf %150, %149 : vector<2x128xf32>
    %152 = arith.mulf %146, %151 : vector<2x128xf32>
    %cst_27 = arith.constant 5.000000e-01 : f32
    %153 = vector.broadcast %cst_27 : f32 to vector<2x128xf32>
    %154 = arith.mulf %153, %128 : vector<2x128xf32>
    %cst_28 = arith.constant 0.707106769 : f32
    %155 = vector.broadcast %cst_28 : f32 to vector<2x128xf32>
    %156 = arith.mulf %128, %155 : vector<2x128xf32>
    %157 = math.erf %156 : vector<2x128xf32>
    %cst_29 = arith.constant 1.000000e+00 : f32
    %158 = vector.broadcast %cst_29 : f32 to vector<2x128xf32>
    %159 = arith.addf %158, %157 : vector<2x128xf32>
    %160 = arith.mulf %154, %159 : vector<2x128xf32>
    %161 = arith.addf %136, %144 : vector<2x128xf32>
    %162 = arith.addf %161, %152 : vector<2x128xf32>
    %163 = arith.addf %162, %160 : vector<2x128xf32>
    %cst_30 = arith.constant 2.500000e-01 : f32
    %164 = vector.broadcast %cst_30 : f32 to vector<2x128xf32>
    %165 = arith.mulf %163, %164 : vector<2x128xf32>
    %166 = arith.subf %136, %165 : vector<2x128xf32>
    %167 = arith.subf %144, %165 : vector<2x128xf32>
    %168 = arith.subf %152, %165 : vector<2x128xf32>
    %169 = arith.subf %160, %165 : vector<2x128xf32>
    %170 = arith.mulf %166, %166 : vector<2x128xf32>
    %171 = arith.mulf %167, %167 : vector<2x128xf32>
    %172 = arith.addf %170, %171 : vector<2x128xf32>
    %173 = arith.mulf %168, %168 : vector<2x128xf32>
    %174 = arith.addf %172, %173 : vector<2x128xf32>
    %175 = arith.mulf %169, %169 : vector<2x128xf32>
    %176 = arith.addf %174, %175 : vector<2x128xf32>
    %cst_31 = arith.constant 2.500000e-01 : f32
    %177 = vector.broadcast %cst_31 : f32 to vector<2x128xf32>
    %178 = arith.mulf %176, %177 : vector<2x128xf32>
    %cst_32 = arith.constant 9.99999997E-7 : f32
    %179 = vector.broadcast %cst_32 : f32 to vector<2x128xf32>
    %180 = arith.addf %178, %179 : vector<2x128xf32>
    %181 = math.rsqrt %180 : vector<2x128xf32>
    %182 = arith.mulf %166, %181 : vector<2x128xf32>
    %c28 = arith.constant 28 : index
    %183 = memref.load %arg2[%c28] : memref<61xf32, #tpu.memory_space<smem>>
    %184 = vector.broadcast %183 : f32 to vector<2x128xf32>
    %185 = arith.mulf %182, %184 : vector<2x128xf32>
    %c32 = arith.constant 32 : index
    %186 = memref.load %arg2[%c32] : memref<61xf32, #tpu.memory_space<smem>>
    %187 = vector.broadcast %186 : f32 to vector<2x128xf32>
    %188 = arith.addf %185, %187 : vector<2x128xf32>
    %189 = arith.mulf %167, %181 : vector<2x128xf32>
    %c29 = arith.constant 29 : index
    %190 = memref.load %arg2[%c29] : memref<61xf32, #tpu.memory_space<smem>>
    %191 = vector.broadcast %190 : f32 to vector<2x128xf32>
    %192 = arith.mulf %189, %191 : vector<2x128xf32>
    %c33 = arith.constant 33 : index
    %193 = memref.load %arg2[%c33] : memref<61xf32, #tpu.memory_space<smem>>
    %194 = vector.broadcast %193 : f32 to vector<2x128xf32>
    %195 = arith.addf %192, %194 : vector<2x128xf32>
    %196 = arith.mulf %168, %181 : vector<2x128xf32>
    %c30 = arith.constant 30 : index
    %197 = memref.load %arg2[%c30] : memref<61xf32, #tpu.memory_space<smem>>
    %198 = vector.broadcast %197 : f32 to vector<2x128xf32>
    %199 = arith.mulf %196, %198 : vector<2x128xf32>
    %c34 = arith.constant 34 : index
    %200 = memref.load %arg2[%c34] : memref<61xf32, #tpu.memory_space<smem>>
    %201 = vector.broadcast %200 : f32 to vector<2x128xf32>
    %202 = arith.addf %199, %201 : vector<2x128xf32>
    %203 = arith.mulf %169, %181 : vector<2x128xf32>
    %c31 = arith.constant 31 : index
    %204 = memref.load %arg2[%c31] : memref<61xf32, #tpu.memory_space<smem>>
    %205 = vector.broadcast %204 : f32 to vector<2x128xf32>
    %206 = arith.mulf %203, %205 : vector<2x128xf32>
    %c35 = arith.constant 35 : index
    %207 = memref.load %arg2[%c35] : memref<61xf32, #tpu.memory_space<smem>>
    %208 = vector.broadcast %207 : f32 to vector<2x128xf32>
    %209 = arith.addf %206, %208 : vector<2x128xf32>
    %c36 = arith.constant 36 : index
    %210 = memref.load %arg2[%c36] : memref<61xf32, #tpu.memory_space<smem>>
    %211 = vector.broadcast %210 : f32 to vector<2x128xf32>
    %212 = arith.mulf %188, %211 : vector<2x128xf32>
    %c37 = arith.constant 37 : index
    %213 = memref.load %arg2[%c37] : memref<61xf32, #tpu.memory_space<smem>>
    %214 = vector.broadcast %213 : f32 to vector<2x128xf32>
    %215 = arith.mulf %195, %214 : vector<2x128xf32>
    %216 = arith.addf %212, %215 : vector<2x128xf32>
    %c38 = arith.constant 38 : index
    %217 = memref.load %arg2[%c38] : memref<61xf32, #tpu.memory_space<smem>>
    %218 = vector.broadcast %217 : f32 to vector<2x128xf32>
    %219 = arith.mulf %202, %218 : vector<2x128xf32>
    %220 = arith.addf %216, %219 : vector<2x128xf32>
    %c39 = arith.constant 39 : index
    %221 = memref.load %arg2[%c39] : memref<61xf32, #tpu.memory_space<smem>>
    %222 = vector.broadcast %221 : f32 to vector<2x128xf32>
    %223 = arith.mulf %209, %222 : vector<2x128xf32>
    %224 = arith.addf %220, %223 : vector<2x128xf32>
    %c40 = arith.constant 40 : index
    %225 = memref.load %arg2[%c40] : memref<61xf32, #tpu.memory_space<smem>>
    %226 = vector.broadcast %225 : f32 to vector<2x128xf32>
    %227 = arith.addf %224, %226 : vector<2x128xf32>
    %228 = arith.mulf %227, %136 : vector<2x128xf32>
    %229 = arith.mulf %227, %144 : vector<2x128xf32>
    %230 = arith.mulf %227, %152 : vector<2x128xf32>
    %231 = arith.mulf %227, %160 : vector<2x128xf32>
    %c41 = arith.constant 41 : index
    %232 = memref.load %arg2[%c41] : memref<61xf32, #tpu.memory_space<smem>>
    %233 = vector.broadcast %232 : f32 to vector<2x128xf32>
    %234 = arith.mulf %228, %233 : vector<2x128xf32>
    %c42 = arith.constant 42 : index
    %235 = memref.load %arg2[%c42] : memref<61xf32, #tpu.memory_space<smem>>
    %236 = vector.broadcast %235 : f32 to vector<2x128xf32>
    %237 = arith.mulf %229, %236 : vector<2x128xf32>
    %238 = arith.addf %234, %237 : vector<2x128xf32>
    %c43 = arith.constant 43 : index
    %239 = memref.load %arg2[%c43] : memref<61xf32, #tpu.memory_space<smem>>
    %240 = vector.broadcast %239 : f32 to vector<2x128xf32>
    %241 = arith.mulf %230, %240 : vector<2x128xf32>
    %242 = arith.addf %238, %241 : vector<2x128xf32>
    %c44 = arith.constant 44 : index
    %243 = memref.load %arg2[%c44] : memref<61xf32, #tpu.memory_space<smem>>
    %244 = vector.broadcast %243 : f32 to vector<2x128xf32>
    %245 = arith.mulf %231, %244 : vector<2x128xf32>
    %246 = arith.addf %242, %245 : vector<2x128xf32>
    %c57 = arith.constant 57 : index
    %247 = memref.load %arg2[%c57] : memref<61xf32, #tpu.memory_space<smem>>
    %248 = vector.broadcast %247 : f32 to vector<2x128xf32>
    %249 = arith.addf %246, %248 : vector<2x128xf32>
    %c45 = arith.constant 45 : index
    %250 = memref.load %arg2[%c45] : memref<61xf32, #tpu.memory_space<smem>>
    %251 = vector.broadcast %250 : f32 to vector<2x128xf32>
    %252 = arith.mulf %228, %251 : vector<2x128xf32>
    %c46 = arith.constant 46 : index
    %253 = memref.load %arg2[%c46] : memref<61xf32, #tpu.memory_space<smem>>
    %254 = vector.broadcast %253 : f32 to vector<2x128xf32>
    %255 = arith.mulf %229, %254 : vector<2x128xf32>
    %256 = arith.addf %252, %255 : vector<2x128xf32>
    %c47 = arith.constant 47 : index
    %257 = memref.load %arg2[%c47] : memref<61xf32, #tpu.memory_space<smem>>
    %258 = vector.broadcast %257 : f32 to vector<2x128xf32>
    %259 = arith.mulf %230, %258 : vector<2x128xf32>
    %260 = arith.addf %256, %259 : vector<2x128xf32>
    %c48 = arith.constant 48 : index
    %261 = memref.load %arg2[%c48] : memref<61xf32, #tpu.memory_space<smem>>
    %262 = vector.broadcast %261 : f32 to vector<2x128xf32>
    %263 = arith.mulf %231, %262 : vector<2x128xf32>
    %264 = arith.addf %260, %263 : vector<2x128xf32>
    %c58 = arith.constant 58 : index
    %265 = memref.load %arg2[%c58] : memref<61xf32, #tpu.memory_space<smem>>
    %266 = vector.broadcast %265 : f32 to vector<2x128xf32>
    %267 = arith.addf %264, %266 : vector<2x128xf32>
    %c49 = arith.constant 49 : index
    %268 = memref.load %arg2[%c49] : memref<61xf32, #tpu.memory_space<smem>>
    %269 = vector.broadcast %268 : f32 to vector<2x128xf32>
    %270 = arith.mulf %228, %269 : vector<2x128xf32>
    %c50 = arith.constant 50 : index
    %271 = memref.load %arg2[%c50] : memref<61xf32, #tpu.memory_space<smem>>
    %272 = vector.broadcast %271 : f32 to vector<2x128xf32>
    %273 = arith.mulf %229, %272 : vector<2x128xf32>
    %274 = arith.addf %270, %273 : vector<2x128xf32>
    %c51 = arith.constant 51 : index
    %275 = memref.load %arg2[%c51] : memref<61xf32, #tpu.memory_space<smem>>
    %276 = vector.broadcast %275 : f32 to vector<2x128xf32>
    %277 = arith.mulf %230, %276 : vector<2x128xf32>
    %278 = arith.addf %274, %277 : vector<2x128xf32>
    %c52 = arith.constant 52 : index
    %279 = memref.load %arg2[%c52] : memref<61xf32, #tpu.memory_space<smem>>
    %280 = vector.broadcast %279 : f32 to vector<2x128xf32>
    %281 = arith.mulf %231, %280 : vector<2x128xf32>
    %282 = arith.addf %278, %281 : vector<2x128xf32>
    %c59 = arith.constant 59 : index
    %283 = memref.load %arg2[%c59] : memref<61xf32, #tpu.memory_space<smem>>
    %284 = vector.broadcast %283 : f32 to vector<2x128xf32>
    %285 = arith.addf %282, %284 : vector<2x128xf32>
    %c53 = arith.constant 53 : index
    %286 = memref.load %arg2[%c53] : memref<61xf32, #tpu.memory_space<smem>>
    %287 = vector.broadcast %286 : f32 to vector<2x128xf32>
    %288 = arith.mulf %228, %287 : vector<2x128xf32>
    %c54 = arith.constant 54 : index
    %289 = memref.load %arg2[%c54] : memref<61xf32, #tpu.memory_space<smem>>
    %290 = vector.broadcast %289 : f32 to vector<2x128xf32>
    %291 = arith.mulf %229, %290 : vector<2x128xf32>
    %292 = arith.addf %288, %291 : vector<2x128xf32>
    %c55 = arith.constant 55 : index
    %293 = memref.load %arg2[%c55] : memref<61xf32, #tpu.memory_space<smem>>
    %294 = vector.broadcast %293 : f32 to vector<2x128xf32>
    %295 = arith.mulf %230, %294 : vector<2x128xf32>
    %296 = arith.addf %292, %295 : vector<2x128xf32>
    %c56 = arith.constant 56 : index
    %297 = memref.load %arg2[%c56] : memref<61xf32, #tpu.memory_space<smem>>
    %298 = vector.broadcast %297 : f32 to vector<2x128xf32>
    %299 = arith.mulf %231, %298 : vector<2x128xf32>
    %300 = arith.addf %296, %299 : vector<2x128xf32>
    %c60 = arith.constant 60 : index
    %301 = memref.load %arg2[%c60] : memref<61xf32, #tpu.memory_space<smem>>
    %302 = vector.broadcast %301 : f32 to vector<2x128xf32>
    %303 = arith.addf %300, %302 : vector<2x128xf32>
    %c0_33 = arith.constant 0 : index
    %c0_34 = arith.constant 0 : index
    %c0_35 = arith.constant 0 : index
    %c0_36 = arith.constant 0 : index
    %304 = vector.load %arg4[%c0_33, %c0_34, %c0_35, %c0_36] : memref<1x4x2x128xf32, #tpu.memory_space<vmem>>, vector<1x1x2x128xf32>
    %305 = vector.shape_cast %304 : vector<1x1x2x128xf32> to vector<2x128xf32>
    %306 = vector.shape_cast %249 : vector<2x128xf32> to vector<1x1x2x128xf32>
    tpu.vector_store %arg4[%c0_33, %c0_34, %c0_35, %c0_36], %306 {strides = array<i32>} : memref<1x4x2x128xf32, #tpu.memory_space<vmem>>, vector<1x1x2x128xf32>,
    %c0_37 = arith.constant 0 : index
    %c1_38 = arith.constant 1 : index
    %c0_39 = arith.constant 0 : index
    %c0_40 = arith.constant 0 : index
    %307 = vector.load %arg4[%c0_37, %c1_38, %c0_39, %c0_40] : memref<1x4x2x128xf32, #tpu.memory_space<vmem>>, vector<1x1x2x128xf32>
    %308 = vector.shape_cast %307 : vector<1x1x2x128xf32> to vector<2x128xf32>
    %309 = vector.shape_cast %267 : vector<2x128xf32> to vector<1x1x2x128xf32>
    tpu.vector_store %arg4[%c0_37, %c1_38, %c0_39, %c0_40], %309 {strides = array<i32>} : memref<1x4x2x128xf32, #tpu.memory_space<vmem>>, vector<1x1x2x128xf32>,
    %c0_41 = arith.constant 0 : index
    %c2_42 = arith.constant 2 : index
    %c0_43 = arith.constant 0 : index
    %c0_44 = arith.constant 0 : index
    %310 = vector.load %arg4[%c0_41, %c2_42, %c0_43, %c0_44] : memref<1x4x2x128xf32, #tpu.memory_space<vmem>>, vector<1x1x2x128xf32>
    %311 = vector.shape_cast %310 : vector<1x1x2x128xf32> to vector<2x128xf32>
    %312 = vector.shape_cast %285 : vector<2x128xf32> to vector<1x1x2x128xf32>
    tpu.vector_store %arg4[%c0_41, %c2_42, %c0_43, %c0_44], %312 {strides = array<i32>} : memref<1x4x2x128xf32, #tpu.memory_space<vmem>>, vector<1x1x2x128xf32>,
    %c0_45 = arith.constant 0 : index
    %c3_46 = arith.constant 3 : index
    %c0_47 = arith.constant 0 : index
    %c0_48 = arith.constant 0 : index
    %313 = vector.load %arg4[%c0_45, %c3_46, %c0_47, %c0_48] : memref<1x4x2x128xf32, #tpu.memory_space<vmem>>, vector<1x1x2x128xf32>
    %314 = vector.shape_cast %313 : vector<1x1x2x128xf32> to vector<2x128xf32>
    %315 = vector.shape_cast %303 : vector<2x128xf32> to vector<1x1x2x128xf32>
    tpu.vector_store %arg4[%c0_45, %c3_46, %c0_47, %c0_48], %315 {strides = array<i32>} : memref<1x4x2x128xf32, #tpu.memory_space<vmem>>, vector<1x1x2x128xf32>,
    return
  }
  func.func @transform_0(%arg0: i32, %arg1: i32) -> i32 {
    %c0_i32 = arith.constant 0 : i32
    %c0_i32_0 = arith.constant 0 : i32
    return %c0_i32 : i32
  }
  func.func @transform_1(%arg0: i32, %arg1: i32) -> (i32, i32, i32, i32) {
    %c0_i32 = arith.constant 0 : i32
    %c0_i32_0 = arith.constant 0 : i32
    %c0_i32_1 = arith.constant 0 : i32
    return %arg0, %c0_i32, %arg1, %c0_i32_0 : i32, i32, i32, i32
  }
  func.func @transform_2(%arg0: i32, %arg1: i32) -> (i32, i32, i32, i32) {
    %c0_i32 = arith.constant 0 : i32
    %c0_i32_0 = arith.constant 0 : i32
    %c0_i32_1 = arith.constant 0 : i32
    return %arg0, %c0_i32, %arg1, %c0_i32_0 : i32, i32, i32, i32
  }
}

</mosaic_0001>

<llo_original>
// kernel: tpu_custom_call.1
$region0: #{tpu_custom_call.1}
  #allocation0 [shape = 'u32[]', space=smem, size = 0x4, offset = 0x4, fixed_abs, tag = 'smem constant byte address 0x4 - core index']
  #allocation1 [shape = 'u32[144,128]{1,0:T(1,128)}', space=vmem, size = 0x12000, scoped, tag = 'internal scratch']
  %s0 = inlined_call_operand.hbm [shape: f32[61], index: 0, kind: input, shape index: {}]
  %s1 = inlined_call_operand.hbm [shape: f32[2,4,2,128], index: 1, kind: input, shape index: {}]
  %s2 = inlined_call_operand.hbm [shape: f32[2,4,2,128], index: 2, kind: output, shape index: {}]
  %s3 = sld [smem:[#allocation0]]
  $region49: #{tpu_custom_call.1} parent=0
    _
  %s5 = ssub.s32 1, %s3
  %s6 = scalar_select 0, %s5, %s3
  $region1: #{tpu_custom_call.1} parent=0
    #allocation2 [shape = 'u8[512]{0}', space=smem, size = 0x200, scoped, tag = 'input window, operand 0, single buffered']
    #allocation3 [shape = 's32[2]{0}', space=sflag, size = 0x8, scoped, tag = 'scoped memory for tpu_custom_call.1']
    #allocation4 [shape = 's32[2]{0}', space=sflag, size = 0x8, scoped, tag = 'scoped memory for tpu_custom_call.1']
    #allocation5 [shape = 's32[2]{0}', space=sflag, size = 0x8, scoped, tag = 'scoped memory for tpu_custom_call.1']
    #allocation6 [shape = 'u8[8192]{0}', space=vmem, size = 0x2000, scoped, tag = 'input window, operand 1']
    #allocation7 [shape = 'u8[8192]{0}', space=vmem, size = 0x2000, scoped, tag = 'output window, operand 0']
    %7 = vsyncpa [#allocation5], 0
    %8 = vsyncpa [#allocation3], 0
    %s9 = scalar_lea.sflag [#allocation3], 1
    %10 = vsyncpa %s9, 0
    %11 = vsyncpa [#allocation4], 0
    %s12 = scalar_lea.sflag [#allocation4], 1
    %13 = vsyncpa %s12, 0
    loop: start=0, step=1, limit=4
    $region2: #{tpu_custom_call.1} parent=1 // loop_pre_header
      _
    $region3: #{tpu_custom_call.1} parent=1 // loop_header
      %s15 = sphi 0, %s19
      %p16 = scmp.ge.s32.totalorder %s15, 4
      %s22 = sphi 0, %s34
      %s23 = sphi 0, %s30
      %s24 = sphi 0, %s22
      %s25 = sphi 0, %s23
      %s26 = sphi 0, %s24
      %s27 = sphi 0, %s25
      %s35 = sphi 0, %s35
      %s37 = sphi 0, %s35
      %s38 = sphi 0, %s37
      %s52 = sphi 0, %s38
      %s60 = sphi 0, %s62
      %s63 = sphi 0, %s60
      %s64 = sphi 0, %s63
      %s80 = sphi 0, %s64
      %s88 = sphi 0, %s90
      %s91 = sphi 0, %s88
      %s92 = sphi 0, %s91
      %s108 = sphi 0, %s92
    $region4: #{tpu_custom_call.1} parent=1 // loop_header_branch
      %18 = sbr.rel (%p16) target = $region8
    $region5: #{tpu_custom_call.1} parent=1 // loop_body
      %s20 = ssub.s32 %s15, 1
      %s21 = ssub.s32 %s15, 2
      %s28 = sadd.s32 1, %s23
      %p29 = scmp.ge.s32.totalorder %s28, 1
      %s30 = scalar_select %p29, 0, %s28
      %s31 = sadd.s32 1, %s22
      %s32 = scalar_select %p29, %s31, %s22
      %p33 = scmp.ge.s32.totalorder %s32, 2
      %s34 = scalar_select %p33, 0, %s32
      %s36 = sadd.s32 %s35, 1
      %p39 = scmp.eq.s32.totalorder %s15, 1
      %p40 = scmp.ne.s32.totalorder %s35, %s37
      %p41 = scmp.eq.s32.totalorder %s15, 0
      %p42 = por %p40, %p41
      %p43 = scmp.ne.s32.totalorder %s35, %s37
      %p44 = scmp.eq.s32.totalorder %s20, 1
      %p45 = por %p43, %p44
      %p46 = scmp.ne.s32.totalorder %s37, %s38
      %p47 = scmp.eq.s32.totalorder %s20, 0
      %p48 = por %p46, %p47
      %p49 = scmp.ne.s32.totalorder %s37, %s38
      %p50 = scmp.eq.s32.totalorder %s21, 1
      %p51 = por %p49, %p50
      %p53 = scmp.ne.s32.totalorder %s38, %s52
      %p54 = scmp.eq.s32.totalorder %s21, 0
      %p55 = por %p53, %p54
      %s56 = ssub.s32 %s22, %s34
      %s57 = ssub.s32 %s23, %s30
      %s58 = sor.u32 %s56, %s57
      %p59 = scmp.eq.s32.totalorder %s58, 0
      %s61 = sadd.s32 %s60, 1
      %s62 = scalar_select %p59, %s60, %s61
      %p65 = pneg %p59
      %p66 = scmp.eq.s32.totalorder %s15, 1
      %p67 = por %p65, %p66
      %p68 = scmp.ne.s32.totalorder %s60, %s63
      %p69 = scmp.eq.s32.totalorder %s15, 0
      %p70 = por %p68, %p69
      %p71 = scmp.ne.s32.totalorder %s60, %s63
      %p72 = scmp.eq.s32.totalorder %s20, 1
      %p73 = por %p71, %p72
      %p74 = scmp.ne.s32.totalorder %s63, %s64
      %p75 = scmp.eq.s32.totalorder %s20, 0
      %p76 = por %p74, %p75
      %p77 = scmp.ne.s32.totalorder %s63, %s64
      %p78 = scmp.eq.s32.totalorder %s21, 1
      %p79 = por %p77, %p78
      %p81 = scmp.ne.s32.totalorder %s64, %s80
      %p82 = scmp.eq.s32.totalorder %s21, 0
      %p83 = por %p81, %p82
      %s84 = ssub.s32 %s22, %s34
      %s85 = ssub.s32 %s23, %s30
      %s86 = sor.u32 %s84, %s85
      %p87 = scmp.eq.s32.totalorder %s86, 0
      %s89 = sadd.s32 %s88, 1
      %s90 = scalar_select %p87, %s88, %s89
      %p93 = pneg %p87
      %p94 = scmp.eq.s32.totalorder %s15, 1
      %p95 = por %p93, %p94
      %p96 = scmp.ne.s32.totalorder %s88, %s91
      %p97 = scmp.eq.s32.totalorder %s15, 0
      %p98 = por %p96, %p97
      %p99 = scmp.ne.s32.totalorder %s88, %s91
      %p100 = scmp.eq.s32.totalorder %s20, 1
      %p101 = por %p99, %p100
      %p102 = scmp.ne.s32.totalorder %s91, %s92
      %p103 = scmp.eq.s32.totalorder %s20, 0
      %p104 = por %p102, %p103
      %p105 = scmp.ne.s32.totalorder %s91, %s92
      %p106 = scmp.eq.s32.totalorder %s21, 1
      %p107 = por %p105, %p106
      %p109 = scmp.ne.s32.totalorder %s92, %s108
      %p110 = scmp.eq.s32.totalorder %s21, 0
      %p111 = por %p109, %p110
      %p112 = scmp.le.s32.totalorder 1, %s15
      %p113 = scmp.lt.s32.totalorder %s15, 3
      %p114 = pnand %p112, %p113
      %p115 = pneg %p114
      // Predicated region
      $region9: #{tpu_custom_call.1} parent=5 // pred_check
        _
      $region10: #{tpu_custom_call.1} parent=5 // pred_check_branch
        %117 = sbr.rel (%p114) target = $region12
      $region11: #{tpu_custom_call.1} parent=5 // pred_region
        %s118 = ssub.s32 %s15, 1
        // Predicated region
        $region13: #{tpu_custom_call.1} parent=11 // pred_check
          %p119 = pneg %p48
        $region14: #{tpu_custom_call.1} parent=11 // pred_check_branch
          %121 = sbr.rel (%p119) target = $region16
        $region15: #{tpu_custom_call.1} parent=11 // pred_region
          %s123 = ssub.s32 16, 16
          %124 = vsyncadd [#allocation5], %s123
          %127 = dma.hbm_to_smem %s0, 16, [#allocation2], [#allocation5]
        $region16: #{tpu_custom_call.1} parent=11 // pred_fallthru
          _
      $region12: #{tpu_custom_call.1} parent=5 // pred_fallthru
        _
      %p128 = scmp.lt.s32.totalorder %s15, 2
      // Predicated region
      $region17: #{tpu_custom_call.1} parent=5 // pred_check
        %p129 = pneg %p128
      $region18: #{tpu_custom_call.1} parent=5 // pred_check_branch
        %131 = sbr.rel (%p129) target = $region20
      $region19: #{tpu_custom_call.1} parent=5 // pred_region
        // Predicated region
        $region21: #{tpu_custom_call.1} parent=19 // pred_check
          %p132 = pneg %p70
        $region22: #{tpu_custom_call.1} parent=19 // pred_check_branch
          %134 = sbr.rel (%p132) target = $region24
        $region23: #{tpu_custom_call.1} parent=19 // pred_region
          %s135 = sand.u32 %s60, 1
          %s136 = scalar_lea.sflag [#allocation3], %s135
          %s137 = sand.u32 %s60, 1
          %s138 = smul.addr %s137, 8
          %s139 = scalar_lea.vmem [#allocation6], %s138
          %s141 = ssub.s32 128, 128
          %142 = vsyncadd %s136, %s141
          %s143 = smul.addr %s22, 4
          %s144 = sadd.s32 %s23, %s143
          %s145 = smul.addr %s144, 32
          %s146 = scalar_lea.hbm %s1, %s145
          %s147 = sshll.u32 %s139, 4
          %s148 = int_to_ptr.vmem [resolvable:$true] %s147
          %153 = dma.hbm_to_vmem [thread:$0]  %s146, 128, %s148, %s136, 32, 32, 2
        $region24: #{tpu_custom_call.1} parent=19 // pred_fallthru
          _
      $region20: #{tpu_custom_call.1} parent=5 // pred_fallthru
        _
      %p154 = scmp.le.s32.totalorder 1, %s15
      %p155 = scmp.lt.s32.totalorder %s15, 3
      %p156 = pnand %p154, %p155
      %p157 = pneg %p156
      // Predicated region
      $region25: #{tpu_custom_call.1} parent=5 // pred_check
        _
      $region26: #{tpu_custom_call.1} parent=5 // pred_check_branch
        %159 = sbr.rel (%p156) target = $region28
      $region27: #{tpu_custom_call.1} parent=5 // pred_region
        %s160 = ssub.s32 %s15, 1
        // Predicated region
        $region29: #{tpu_custom_call.1} parent=27 // pred_check
          %p161 = pneg %p48
        $region30: #{tpu_custom_call.1} parent=27 // pred_check_branch
          %163 = sbr.rel (%p161) target = $region32
        $region31: #{tpu_custom_call.1} parent=27 // pred_region
          %164 = dma.done [#allocation5], 16
        $region32: #{tpu_custom_call.1} parent=27 // pred_fallthru
          _
        %s165 = sand.u32 %s63, 1
        %s166 = scalar_lea.sflag [#allocation3], %s165
        %s167 = sand.u32 %s63, 1
        %s168 = smul.addr %s167, 8
        %s169 = scalar_lea.vmem [#allocation6], %s168
        // Predicated region
        $region33: #{tpu_custom_call.1} parent=27 // pred_check
          %p170 = pneg %p76
        $region34: #{tpu_custom_call.1} parent=27 // pred_check_branch
          %172 = sbr.rel (%p170) target = $region36
        $region35: #{tpu_custom_call.1} parent=27 // pred_region
          %173 = dma.done %s166, 128
        $region36: #{tpu_custom_call.1} parent=27 // pred_fallthru
          _
        %174 = sfence
        %p175 = pneg %p48
        %p176 = pneg %p45
        %s177 = sand.u32 %s63, 1
        %s178 = scalar_lea.sflag [#allocation3], %s177
        %s179 = sand.u32 %s63, 1
        %s180 = smul.addr %s179, 8
        %s181 = scalar_lea.vmem [#allocation6], %s180
        %p182 = pneg %p76
        %p183 = pneg %p73
        %p184 = pneg %p104
        %p185 = pneg %p101
        %s186 = sand.u32 %s91, 1
        %s187 = scalar_lea.sflag [#allocation4], %s186
        %s188 = sand.u32 %s91, 1
        %s189 = smul.addr %s188, 8
        %s190 = scalar_lea.vmem [#allocation7], %s189
        %v191 = vld [vmem:[%s169] sm:$0x3]
        %s192 = scalar_lea.vmem %s169, 2 [#allocation6]
        %v193 = vld [vmem:[%s192] sm:$0x3]
        %s194 = scalar_lea.vmem %s169, 4 [#allocation6]
        %v195 = vld [vmem:[%s194] sm:$0x3]
        %s196 = scalar_lea.vmem %s169, 6 [#allocation6]
        %v197 = vld [vmem:[%s196] sm:$0x3]
        %v198 = vadd.f32 %v191, %v193
        %v199 = vadd.f32 %v198, %v195
        %v200 = vadd.f32 %v199, %v197
        %v201 = vmul.f32 %v200, 0.25
        %v202 = vsub.f32 %v191, %v201
        %v203 = vsub.f32 %v193, %v201
        %v204 = vsub.f32 %v195, %v201
        %v205 = vsub.f32 %v197, %v201
        %v206 = vmul.f32 %v202, %v202
        %v207 = vmul.f32 %v203, %v203
        %v208 = vadd.f32 %v206, %v207
        %v209 = vmul.f32 %v204, %v204
        %v210 = vadd.f32 %v208, %v209
        %v211 = vmul.f32 %v205, %v205
        %v212 = vadd.f32 %v210, %v211
        %v213 = vmul.f32 %v212, 0.25
        %v214 = vadd.f32 %v213, 1e-06
        %v215 = vrsqrt.pop %v214
        %v216 = vmul.f32 %v202, %v215
        %s217 = sld [smem:[#allocation2]]
        %v218 = vstv %s217
        %v219 = vmul.f32 %v216, %v218
        %s220 = sld [smem:[#allocation2 + $0x4]]
        %v221 = vstv %s220
        %v222 = vadd.f32 %v219, %v221
        %v223 = vmul.f32 %v203, %v215
        %s224 = sld [smem:[#allocation2 + $0x1]]
        %v225 = vstv %s224
        %v226 = vmul.f32 %v223, %v225
        %s227 = sld [smem:[#allocation2 + $0x5]]
        %v228 = vstv %s227
        %v229 = vadd.f32 %v226, %v228
        %v230 = vmul.f32 %v204, %v215
        %s231 = sld [smem:[#allocation2 + $0x2]]
        %v232 = vstv %s231
        %v233 = vmul.f32 %v230, %v232
        %s234 = sld [smem:[#allocation2 + $0x6]]
        %v235 = vstv %s234
        %v236 = vadd.f32 %v233, %v235
        %v237 = vmul.f32 %v205, %v215
        %s238 = sld [smem:[#allocation2 + $0x3]]
        %v239 = vstv %s238
        %v240 = vmul.f32 %v237, %v239
        %s241 = sld [smem:[#allocation2 + $0x7]]
        %v242 = vstv %s241
        %v243 = vadd.f32 %v240, %v242
        %s244 = sld [smem:[#allocation2 + $0x8]]
        %v245 = vstv %s244
        %v246 = vmul.f32 %v222, %v245
        %s247 = sld [smem:[#allocation2 + $0x9]]
        %v248 = vstv %s247
        %v249 = vmul.f32 %v229, %v248
        %v250 = vadd.f32 %v246, %v249
        %s251 = sld [smem:[#allocation2 + $0xa]]
        %v252 = vstv %s251
        %v253 = vmul.f32 %v236, %v252
        %v254 = vadd.f32 %v250, %v253
        %s255 = sld [smem:[#allocation2 + $0xb]]
        %v256 = vstv %s255
        %v257 = vmul.f32 %v243, %v256
        %v258 = vadd.f32 %v254, %v257
        %s259 = sld [smem:[#allocation2 + $0x18]]
        %v260 = vstv %s259
        %v261 = vadd.f32 %v258, %v260
        %s262 = sld [smem:[#allocation2 + $0xc]]
        %v263 = vstv %s262
        %v264 = vmul.f32 %v222, %v263
        %s265 = sld [smem:[#allocation2 + $0xd]]
        %v266 = vstv %s265
        %v267 = vmul.f32 %v229, %v266
        %v268 = vadd.f32 %v264, %v267
        %s269 = sld [smem:[#allocation2 + $0xe]]
        %v270 = vstv %s269
        %v271 = vmul.f32 %v236, %v270
        %v272 = vadd.f32 %v268, %v271
        %s273 = sld [smem:[#allocation2 + $0xf]]
        %v274 = vstv %s273
        %v275 = vmul.f32 %v243, %v274
        %v276 = vadd.f32 %v272, %v275
        %s277 = sld [smem:[#allocation2 + $0x19]]
        %v278 = vstv %s277
        %v279 = vadd.f32 %v276, %v278
        %s280 = sld [smem:[#allocation2 + $0x10]]
        %v281 = vstv %s280
        %v282 = vmul.f32 %v222, %v281
        %s283 = sld [smem:[#allocation2 + $0x11]]
        %v284 = vstv %s283
        %v285 = vmul.f32 %v229, %v284
        %v286 = vadd.f32 %v282, %v285
        %s287 = sld [smem:[#allocation2 + $0x12]]
        %v288 = vstv %s287
        %v289 = vmul.f32 %v236, %v288
        %v290 = vadd.f32 %v286, %v289
        %s291 = sld [smem:[#allocation2 + $0x13]]
        %v292 = vstv %s291
        %v293 = vmul.f32 %v243, %v292
        %v294 = vadd.f32 %v290, %v293
        %s295 = sld [smem:[#allocation2 + $0x1a]]
        %v296 = vstv %s295
        %v297 = vadd.f32 %v294, %v296
        %s298 = sld [smem:[#allocation2 + $0x14]]
        %v299 = vstv %s298
        %v300 = vmul.f32 %v222, %v299
        %s301 = sld [smem:[#allocation2 + $0x15]]
        %v302 = vstv %s301
        %v303 = vmul.f32 %v229, %v302
        %v304 = vadd.f32 %v300, %v303
        %s305 = sld [smem:[#allocation2 + $0x16]]
        %v306 = vstv %s305
        %v307 = vmul.f32 %v236, %v306
        %v308 = vadd.f32 %v304, %v307
        %s309 = sld [smem:[#allocation2 + $0x17]]
        %v310 = vstv %s309
        %v311 = vmul.f32 %v243, %v310
        %v312 = vadd.f32 %v308, %v311
        %s313 = sld [smem:[#allocation2 + $0x1b]]
        %v314 = vstv %s313
        %v315 = vadd.f32 %v312, %v314
        %v316 = vmul.f32 %v261, 0.5
        %v317 = vmul.f32 %v261, 0.70710677
        %v318 = verf.f32.pop %v317
        %v319 = vadd.f32 %v318, 1.0
        %v320 = vmul.f32 %v316, %v319
        %v321 = vmul.f32 %v279, 0.5
        %v322 = vmul.f32 %v279, 0.70710677
        %v323 = verf.f32.pop %v322
        %v324 = vadd.f32 %v323, 1.0
        %v325 = vmul.f32 %v321, %v324
        %v326 = vmul.f32 %v297, 0.5
        %v327 = vmul.f32 %v297, 0.70710677
        %v328 = verf.f32.pop %v327
        %v329 = vadd.f32 %v328, 1.0
        %v330 = vmul.f32 %v326, %v329
        %v331 = vmul.f32 %v315, 0.5
        %v332 = vmul.f32 %v315, 0.70710677
        %v333 = verf.f32.pop %v332
        %v334 = vadd.f32 %v333, 1.0
        %v335 = vmul.f32 %v331, %v334
        %v336 = vadd.f32 %v320, %v325
        %v337 = vadd.f32 %v336, %v330
        %v338 = vadd.f32 %v337, %v335
        %v339 = vmul.f32 %v338, 0.25
        %v340 = vsub.f32 %v320, %v339
        %v341 = vsub.f32 %v325, %v339
        %v342 = vsub.f32 %v330, %v339
        %v343 = vsub.f32 %v335, %v339
        %v344 = vmul.f32 %v340, %v340
        %v345 = vmul.f32 %v341, %v341
        %v346 = vadd.f32 %v344, %v345
        %v347 = vmul.f32 %v342, %v342
        %v348 = vadd.f32 %v346, %v347
        %v349 = vmul.f32 %v343, %v343
        %v350 = vadd.f32 %v348, %v349
        %v351 = vmul.f32 %v350, 0.25
        %v352 = vadd.f32 %v351, 1e-06
        %v353 = vrsqrt.pop %v352
        %v354 = vmul.f32 %v340, %v353
        %s355 = sld [smem:[#allocation2 + $0x1c]]
        %v356 = vstv %s355
        %v357 = vmul.f32 %v354, %v356
        %s358 = sld [smem:[#allocation2 + $0x20]]
        %v359 = vstv %s358
        %v360 = vadd.f32 %v357, %v359
        %v361 = vmul.f32 %v341, %v353
        %s362 = sld [smem:[#allocation2 + $0x1d]]
        %v363 = vstv %s362
        %v364 = vmul.f32 %v361, %v363
        %s365 = sld [smem:[#allocation2 + $0x21]]
        %v366 = vstv %s365
        %v367 = vadd.f32 %v364, %v366
        %v368 = vmul.f32 %v342, %v353
        %s369 = sld [smem:[#allocation2 + $0x1e]]
        %v370 = vstv %s369
        %v371 = vmul.f32 %v368, %v370
        %s372 = sld [smem:[#allocation2 + $0x22]]
        %v373 = vstv %s372
        %v374 = vadd.f32 %v371, %v373
        %v375 = vmul.f32 %v343, %v353
        %s376 = sld [smem:[#allocation2 + $0x1f]]
        %v377 = vstv %s376
        %v378 = vmul.f32 %v375, %v377
        %s379 = sld [smem:[#allocation2 + $0x23]]
        %v380 = vstv %s379
        %v381 = vadd.f32 %v378, %v380
        %s382 = sld [smem:[#allocation2 + $0x24]]
        %v383 = vstv %s382
        %v384 = vmul.f32 %v360, %v383
        %s385 = sld [smem:[#allocation2 + $0x25]]
        %v386 = vstv %s385
        %v387 = vmul.f32 %v367, %v386
        %v388 = vadd.f32 %v384, %v387
        %s389 = sld [smem:[#allocation2 + $0x26]]
        %v390 = vstv %s389
        %v391 = vmul.f32 %v374, %v390
        %v392 = vadd.f32 %v388, %v391
        %s393 = sld [smem:[#allocation2 + $0x27]]
        %v394 = vstv %s393
        %v395 = vmul.f32 %v381, %v394
        %v396 = vadd.f32 %v392, %v395
        %s397 = sld [smem:[#allocation2 + $0x28]]
        %v398 = vstv %s397
        %v399 = vadd.f32 %v396, %v398
        %v400 = vmul.f32 %v399, %v320
        %v401 = vmul.f32 %v399, %v325
        %v402 = vmul.f32 %v399, %v330
        %v403 = vmul.f32 %v399, %v335
        %s404 = sld [smem:[#allocation2 + $0x29]]
        %v405 = vstv %s404
        %v406 = vmul.f32 %v400, %v405
        %s407 = sld [smem:[#allocation2 + $0x2a]]
        %v408 = vstv %s407
        %v409 = vmul.f32 %v401, %v408
        %v410 = vadd.f32 %v406, %v409
        %s411 = sld [smem:[#allocation2 + $0x2b]]
        %v412 = vstv %s411
        %v413 = vmul.f32 %v402, %v412
        %v414 = vadd.f32 %v410, %v413
        %s415 = sld [smem:[#allocation2 + $0x2c]]
        %v416 = vstv %s415
        %v417 = vmul.f32 %v403, %v416
        %v418 = vadd.f32 %v414, %v417
        %s419 = sld [smem:[#allocation2 + $0x39]]
        %v420 = vstv %s419
        %v421 = vadd.f32 %v418, %v420
        %s422 = sld [smem:[#allocation2 + $0x2d]]
        %v423 = vstv %s422
        %v424 = vmul.f32 %v400, %v423
        %s425 = sld [smem:[#allocation2 + $0x2e]]
        %v426 = vstv %s425
        %v427 = vmul.f32 %v401, %v426
        %v428 = vadd.f32 %v424, %v427
        %s429 = sld [smem:[#allocation2 + $0x2f]]
        %v430 = vstv %s429
        %v431 = vmul.f32 %v402, %v430
        %v432 = vadd.f32 %v428, %v431
        %s433 = sld [smem:[#allocation2 + $0x30]]
        %v434 = vstv %s433
        %v435 = vmul.f32 %v403, %v434
        %v436 = vadd.f32 %v432, %v435
        %s437 = sld [smem:[#allocation2 + $0x3a]]
        %v438 = vstv %s437
        %v439 = vadd.f32 %v436, %v438
        %s440 = sld [smem:[#allocation2 + $0x31]]
        %v441 = vstv %s440
        %v442 = vmul.f32 %v400, %v441
        %s443 = sld [smem:[#allocation2 + $0x32]]
        %v444 = vstv %s443
        %v445 = vmul.f32 %v401, %v444
        %v446 = vadd.f32 %v442, %v445
        %s447 = sld [smem:[#allocation2 + $0x33]]
        %v448 = vstv %s447
        %v449 = vmul.f32 %v402, %v448
        %v450 = vadd.f32 %v446, %v449
        %s451 = sld [smem:[#allocation2 + $0x34]]
        %v452 = vstv %s451
        %v453 = vmul.f32 %v403, %v452
        %v454 = vadd.f32 %v450, %v453
        %s455 = sld [smem:[#allocation2 + $0x3b]]
        %v456 = vstv %s455
        %v457 = vadd.f32 %v454, %v456
        %s458 = sld [smem:[#allocation2 + $0x35]]
        %v459 = vstv %s458
        %v460 = vmul.f32 %v400, %v459
        %s461 = sld [smem:[#allocation2 + $0x36]]
        %v462 = vstv %s461
        %v463 = vmul.f32 %v401, %v462
        %v464 = vadd.f32 %v460, %v463
        %s465 = sld [smem:[#allocation2 + $0x37]]
        %v466 = vstv %s465
        %v467 = vmul.f32 %v402, %v466
        %v468 = vadd.f32 %v464, %v467
        %s469 = sld [smem:[#allocation2 + $0x38]]
        %v470 = vstv %s469
        %v471 = vmul.f32 %v403, %v470
        %v472 = vadd.f32 %v468, %v471
        %s473 = sld [smem:[#allocation2 + $0x3c]]
        %v474 = vstv %s473
        %v475 = vadd.f32 %v472, %v474
        %476 = vst [vmem:[%s190] sm:$0x3] %v421
        %s477 = scalar_lea.vmem %s190, 2 [#allocation7]
        %478 = vst [vmem:[%s477] sm:$0x3] %v439
        %s479 = scalar_lea.vmem %s190, 4 [#allocation7]
        %480 = vst [vmem:[%s479] sm:$0x3] %v457
        %s481 = scalar_lea.vmem %s190, 6 [#allocation7]
        %482 = vst [vmem:[%s481] sm:$0x3] %v475
        %s483 = sand.u32 %s91, 1
        %s484 = scalar_lea.sflag [#allocation4], %s483
        %s485 = sand.u32 %s91, 1
        %s486 = smul.addr %s485, 8
        %s487 = scalar_lea.vmem [#allocation7], %s486
        // Predicated region
        $region37: #{tpu_custom_call.1} parent=27 // pred_check
          %p488 = pneg %p101
        $region38: #{tpu_custom_call.1} parent=27 // pred_check_branch
          %490 = sbr.rel (%p488) target = $region40
        $region39: #{tpu_custom_call.1} parent=27 // pred_region
          %s492 = ssub.s32 128, 128
          %493 = vsyncadd %s484, %s492
          %s494 = smul.addr %s24, 4
          %s495 = sadd.s32 %s25, %s494
          %s496 = smul.addr %s495, 32
          %s497 = scalar_lea.hbm %s2, %s496
          %s498 = sshll.u32 %s487, 4
          %s499 = int_to_ptr.vmem [resolvable:$true] %s498
          %504 = dma.vmem_to_hbm [thread:$0]  %s499, 128, %s497, %s484, 32, 32, 2
        $region40: #{tpu_custom_call.1} parent=27 // pred_fallthru
          _
      $region28: #{tpu_custom_call.1} parent=5 // pred_fallthru
        _
      %p505 = scmp.le.s32.totalorder 2, %s15
      // Predicated region
      $region41: #{tpu_custom_call.1} parent=5 // pred_check
        %p506 = pneg %p505
      $region42: #{tpu_custom_call.1} parent=5 // pred_check_branch
        %508 = sbr.rel (%p506) target = $region44
      $region43: #{tpu_custom_call.1} parent=5 // pred_region
        %s509 = ssub.s32 %s15, 2
        // Predicated region
        $region45: #{tpu_custom_call.1} parent=43 // pred_check
          %p510 = pneg %p107
        $region46: #{tpu_custom_call.1} parent=43 // pred_check_branch
          %512 = sbr.rel (%p510) target = $region48
        $region47: #{tpu_custom_call.1} parent=43 // pred_region
          %s513 = sand.u32 %s92, 1
          %s514 = scalar_lea.sflag [#allocation4], %s513
          %s515 = sand.u32 %s92, 1
          %s516 = smul.addr %s515, 8
          %s517 = scalar_lea.vmem [#allocation7], %s516
          %518 = dma.done %s514, 128
        $region48: #{tpu_custom_call.1} parent=43 // pred_fallthru
          _
      $region44: #{tpu_custom_call.1} parent=5 // pred_fallthru
        _
    $region6: #{tpu_custom_call.1} parent=1 // loop_footer
      %s19 = sadd.s32 1, %s15
    $region7: #{tpu_custom_call.1} parent=1 // loop_footer_branch
      %14 = sbr.rel target = $region3
    $region8: #{tpu_custom_call.1} parent=1 // loop_exit
      _
    %519 = vsyncpa [#allocation3], 1
    %s520 = scalar_lea.sflag [#allocation3], 1
    %521 = vsyncpa %s520, 1
    %522 = vsyncpa [#allocation4], 1
    %s523 = scalar_lea.sflag [#allocation4], 1
    %524 = vsyncpa %s523, 1
    %525 = vsyncpa [#allocation5], 1
    %s526 = scalar_lea.sflag [#allocation5], 1
    %527 = vsyncpa %s526, 1

</llo_original>
